<compile_context>
chip_gen: v7x
topology: tpu7x:2x2x1
jax: 0.10.0
libtpu: 0.0.40
codegen_flags: <defaults>
</compile_context>

<pallas_src>
import math
import functools

import jax
import jax.numpy as jnp
from jax.experimental import pallas as pl
from jax.experimental.pallas import tpu as pltpu


def _rsc_kernel(colors_ref, coeff_ref, out_ref, *, cut: int):
    # colors_ref: (TM, TN) f32   coeff_ref: (TM, cut) f32   out_ref: (TM, TN) f32
    x = colors_ref[...]
    co = coeff_ref[...]                      # single VMEM load; sliced in-register below

    pi = jnp.float32(math.pi)
    s1 = jnp.sin(x * pi)                     # EUP
    c1 = jnp.cos(x * pi)                     # EUP — only 2 transcendentals per element
    two_c1 = 2.0 * c1

    # sin((f+1)*pi*x) via the recurrence s_{f+1} = 2*cos(pi*x)*s_f - s_{f-1}
    acc = x + co[:, 0:1] * s1                # f = 0  -> sin(1*pi*x)
    if cut >= 2:
        s_prev = s1
        s_cur = two_c1 * s1                  # f = 1  -> sin(2*pi*x)
        acc = acc + co[:, 1:2] * s_cur
        for f in range(2, cut):              # pure VPU work (muls / adds)
            s_next = two_c1 * s_cur - s_prev
            acc = acc + co[:, f:f + 1] * s_next
            s_prev, s_cur = s_cur, s_next

    out_ref[...] = jnp.clip(acc, 0.0, 1.0)


def random_smooth_color_pallas(img, coeff, cut: int, *,
                               target_tm: int = 256, target_tn: int = 2048):
    """img: (b, c, h, w) float32 in [0,1]; coeff: (b, c, cut) float32 (already * sqrt(T))."""
    b, c, h, w = img.shape
    n = h * w
    bc = b * c

    colors = img.reshape(bc, n).astype(jnp.float32)
    coeff2 = coeff.reshape(bc, cut).astype(jnp.float32)

    # Row tile: a multiple of 8 when actually tiling; otherwise the full dim
    # (full-array-dim blocks are exempt from the (8,128) rule) — no host pad.
    tm = bc if bc <= target_tm else target_tm          # target_tm is a multiple of 8
    # Lane tile: a multiple of 128 when tiling, else the full spatial dim.
    tn = n if n <= target_tn else target_tn            # target_tn is a multiple of 128

    grid = (pl.cdiv(bc, tm), pl.cdiv(n, tn))
    kernel = functools.partial(_rsc_kernel, cut=cut)

    out = pl.pallas_call(
        kernel,
        out_shape=jax.ShapeDtypeStruct((bc, n), jnp.float32),
        grid_spec=pltpu.PrefetchScalarGridSpec(
            num_scalar_prefetch=0,
            grid=grid,
            in_specs=[
                pl.BlockSpec((tm, tn), lambda i, j: (i, j)),
                pl.BlockSpec((tm, cut), lambda i, j: (i, 0)),
            ],
            out_specs=pl.BlockSpec((tm, tn), lambda i, j: (i, j)),
        ),
        compiler_params=pltpu.CompilerParams(
            dimension_semantics=("parallel", "parallel")),
    )(colors, coeff2)

    return out.reshape(b, c, h, w)


def random_smooth_color_ref(img, coeff, cut: int):
    """Pure-JAX reference mirroring the PyTorch math exactly."""
    b, c, h, w = img.shape
    colors = img.reshape(b, c, h * w).astype(jnp.float32)
    k = jnp.arange(1, cut + 1, dtype=jnp.float32)
    freqs = jnp.sin(colors[..., None] * k[None, None, None, :] * math.pi)
    transformed = jnp.einsum('bcf,bcnf->bcn', coeff.astype(jnp.float32), freqs) + colors
    transformed = jnp.clip(transformed, 0.0, 1.0)
    return transformed.reshape(b, c, h, w)


class RandomSmoothColorPallas:
    """JAX/Pallas port of easyrobust RandomSmoothColor (non-stochastic path)."""

    def __init__(self, cut, T, freq_bandwidth=None):
        self.cut = cut
        self.T = T
        self.freq_bandwidth = freq_bandwidth
        # TODO(synk): freq_bandwidth / stochastic paths only change which k's are
        # sampled host-side; the kernel math is identical, so they are omitted here.

    def __call__(self, img, key):
        init_shape = img.shape
        if img.ndim < 4:
            img = img[None, ...]
        b, c, _, _ = img.shape
        coeff = jax.random.normal(key, (b, c, self.cut), dtype=jnp.float32)
        coeff = coeff * jnp.sqrt(jnp.float32(self.T))
        out = random_smooth_color_pallas(img, coeff, self.cut)
        return out.reshape(init_shape)


if __name__ == "__main__":
    key = jax.random.PRNGKey(0)
    k_img, k_coeff = jax.random.split(key)

    # Small shapes: batch=2, channels=4 (module rearranges 'b c h w'), spatial=16.
    b, c, h, w = 2, 4, 16, 16
    cut, T = 8, 0.05

    img = jax.random.uniform(k_img, (b, c, h, w), dtype=jnp.float32)  # values in [0,1]

    module = RandomSmoothColorPallas(cut=cut, T=T)
    out = module(img, k_coeff)
    out = jax.block_until_ready(out)

    # Cross-check against pure-JAX reference with the same coeff draw.
    coeff = jax.random.normal(k_coeff, (b, c, cut), dtype=jnp.float32) * jnp.sqrt(jnp.float32(T))
    ref = jax.block_until_ready(random_smooth_color_ref(img, coeff, cut))

    assert out.shape == img.shape and out.dtype == jnp.float32
    # Chebyshev recurrence drift for cut=8 in f32 is ~1e-6; keep a safe margin.
    assert jnp.max(jnp.abs(out - ref)) < 5e-5

    print("KERNEL_OK")
</pallas_src>

<mosaic_0001>
module attributes {stable_mosaic.version = 11 : i64} {
  func.func @_rsc_kernel(%arg0: i32, %arg1: i32, %arg2: memref<8x256xf32, #tpu.memory_space<vmem>>, %arg3: memref<8x8xf32, #tpu.memory_space<vmem>>, %arg4: memref<8x256xf32, #tpu.memory_space<vmem>>) attributes {dimension_semantics = [#tpu.dimension_semantics<parallel>, #tpu.dimension_semantics<parallel>], iteration_bounds = array<i64: 1, 1>, scalar_prefetch = 0 : i64, scratch_operands = 0 : i64, tpu.core_type = #tpu.core_type<tc>, window_params = [{transform_indices = @transform_0, window_bounds = array<i64: 8, 256>}, {transform_indices = @transform_1, window_bounds = array<i64: 8, 8>}, {transform_indices = @transform_2, window_bounds = array<i64: 8, 256>}]} {
    %c0 = arith.constant 0 : index
    %c0_0 = arith.constant 0 : index
    %0 = vector.load %arg2[%c0, %c0_0] : memref<8x256xf32, #tpu.memory_space<vmem>>, vector<8x256xf32>
    %c0_1 = arith.constant 0 : index
    %c0_2 = arith.constant 0 : index
    %1 = vector.load %arg3[%c0_1, %c0_2] : memref<8x8xf32, #tpu.memory_space<vmem>>, vector<8x8xf32>
    %cst = arith.constant 3.14159274 : f32
    %2 = vector.broadcast %cst : f32 to vector<8x256xf32>
    %3 = arith.mulf %0, %2 : vector<8x256xf32>
    %4 = math.sin %3 : vector<8x256xf32>
    %cst_3 = arith.constant 3.14159274 : f32
    %5 = vector.broadcast %cst_3 : f32 to vector<8x256xf32>
    %6 = arith.mulf %0, %5 : vector<8x256xf32>
    %7 = math.cos %6 : vector<8x256xf32>
    %cst_4 = arith.constant 2.000000e+00 : f32
    %8 = vector.broadcast %cst_4 : f32 to vector<8x256xf32>
    %9 = arith.mulf %8, %7 : vector<8x256xf32>
    %10 = vector.extract_strided_slice %1 {offsets = [0, 0], sizes = [8, 1], strides = [1, 1]} : vector<8x8xf32> to vector<8x1xf32>
    %11 = vector.broadcast %10 : vector<8x1xf32> to vector<8x256xf32>
    %12 = arith.mulf %11, %4 : vector<8x256xf32>
    %13 = arith.addf %0, %12 : vector<8x256xf32>
    %14 = arith.mulf %9, %4 : vector<8x256xf32>
    %15 = vector.extract_strided_slice %1 {offsets = [0, 1], sizes = [8, 1], strides = [1, 1]} : vector<8x8xf32> to vector<8x1xf32>
    %16 = vector.broadcast %15 : vector<8x1xf32> to vector<8x256xf32>
    %17 = arith.mulf %16, %14 : vector<8x256xf32>
    %18 = arith.addf %13, %17 : vector<8x256xf32>
    %19 = arith.mulf %9, %14 : vector<8x256xf32>
    %20 = arith.subf %19, %4 : vector<8x256xf32>
    %21 = vector.extract_strided_slice %1 {offsets = [0, 2], sizes = [8, 1], strides = [1, 1]} : vector<8x8xf32> to vector<8x1xf32>
    %22 = vector.broadcast %21 : vector<8x1xf32> to vector<8x256xf32>
    %23 = arith.mulf %22, %20 : vector<8x256xf32>
    %24 = arith.addf %18, %23 : vector<8x256xf32>
    %25 = arith.mulf %9, %20 : vector<8x256xf32>
    %26 = arith.subf %25, %14 : vector<8x256xf32>
    %27 = vector.extract_strided_slice %1 {offsets = [0, 3], sizes = [8, 1], strides = [1, 1]} : vector<8x8xf32> to vector<8x1xf32>
    %28 = vector.broadcast %27 : vector<8x1xf32> to vector<8x256xf32>
    %29 = arith.mulf %28, %26 : vector<8x256xf32>
    %30 = arith.addf %24, %29 : vector<8x256xf32>
    %31 = arith.mulf %9, %26 : vector<8x256xf32>
    %32 = arith.subf %31, %20 : vector<8x256xf32>
    %33 = vector.extract_strided_slice %1 {offsets = [0, 4], sizes = [8, 1], strides = [1, 1]} : vector<8x8xf32> to vector<8x1xf32>
    %34 = vector.broadcast %33 : vector<8x1xf32> to vector<8x256xf32>
    %35 = arith.mulf %34, %32 : vector<8x256xf32>
    %36 = arith.addf %30, %35 : vector<8x256xf32>
    %37 = arith.mulf %9, %32 : vector<8x256xf32>
    %38 = arith.subf %37, %26 : vector<8x256xf32>
    %39 = vector.extract_strided_slice %1 {offsets = [0, 5], sizes = [8, 1], strides = [1, 1]} : vector<8x8xf32> to vector<8x1xf32>
    %40 = vector.broadcast %39 : vector<8x1xf32> to vector<8x256xf32>
    %41 = arith.mulf %40, %38 : vector<8x256xf32>
    %42 = arith.addf %36, %41 : vector<8x256xf32>
    %43 = arith.mulf %9, %38 : vector<8x256xf32>
    %44 = arith.subf %43, %32 : vector<8x256xf32>
    %45 = vector.extract_strided_slice %1 {offsets = [0, 6], sizes = [8, 1], strides = [1, 1]} : vector<8x8xf32> to vector<8x1xf32>
    %46 = vector.broadcast %45 : vector<8x1xf32> to vector<8x256xf32>
    %47 = arith.mulf %46, %44 : vector<8x256xf32>
    %48 = arith.addf %42, %47 : vector<8x256xf32>
    %49 = arith.mulf %9, %44 : vector<8x256xf32>
    %50 = arith.subf %49, %38 : vector<8x256xf32>
    %51 = vector.extract_strided_slice %1 {offsets = [0, 7], sizes = [8, 1], strides = [1, 1]} : vector<8x8xf32> to vector<8x1xf32>
    %52 = vector.broadcast %51 : vector<8x1xf32> to vector<8x256xf32>
    %53 = arith.mulf %52, %50 : vector<8x256xf32>
    %54 = arith.addf %48, %53 : vector<8x256xf32>
    %cst_5 = arith.constant 0.000000e+00 : f32
    %cst_6 = arith.constant 1.000000e+00 : f32
    %55 = vector.broadcast %cst_5 : f32 to vector<8x256xf32>
    %56 = arith.maximumf %55, %54 : vector<8x256xf32>
    %57 = vector.broadcast %cst_6 : f32 to vector<8x256xf32>
    %58 = arith.minimumf %57, %56 : vector<8x256xf32>
    %c0_7 = arith.constant 0 : index
    %c0_8 = arith.constant 0 : index
    %59 = vector.load %arg4[%c0_7, %c0_8] : memref<8x256xf32, #tpu.memory_space<vmem>>, vector<8x256xf32>
    tpu.vector_store %arg4[%c0_7, %c0_8], %58 {strides = array<i32>} : memref<8x256xf32, #tpu.memory_space<vmem>>, vector<8x256xf32>,
    return
  }
  func.func @transform_0(%arg0: i32, %arg1: i32) -> (i32, i32) {
    %c0_i32 = arith.constant 0 : i32
    return %arg0, %arg1 : i32, i32
  }
  func.func @transform_1(%arg0: i32, %arg1: i32) -> (i32, i32) {
    %c0_i32 = arith.constant 0 : i32
    %c0_i32_0 = arith.constant 0 : i32
    return %arg0, %c0_i32 : i32, i32
  }
  func.func @transform_2(%arg0: i32, %arg1: i32) -> (i32, i32) {
    %c0_i32 = arith.constant 0 : i32
    return %arg0, %arg1 : i32, i32
  }
}

</mosaic_0001>

<llo_original>
// kernel: tpu_custom_call.1
$region0: #{tpu_custom_call.1}
  #allocation0 [shape = 'u32[]', space=smem, size = 0x4, offset = 0x4, fixed_abs, tag = 'smem constant byte address 0x4 - core index']
  #allocation1 [shape = 'u32[144,128]{1,0:T(1,128)}', space=vmem, size = 0x12000, scoped, tag = 'internal scratch']
  %s0 = inlined_call_operand.hbm [shape: f32[8,256], index: 0, kind: input, shape index: {}]
  %s1 = inlined_call_operand.hbm [shape: f32[8,8], index: 1, kind: input, shape index: {}]
  %s2 = inlined_call_operand.hbm [shape: f32[8,256], index: 2, kind: output, shape index: {}]
  %s3 = sld [smem:[#allocation0]]
  $region26: #{tpu_custom_call.1} parent=0
    _
  %s5 = ssub.s32 1, %s3
  %s6 = scalar_select 0, %s5, %s3
  $region1: #{tpu_custom_call.1} parent=0
    #allocation2 [shape = 'u8[8192]{0}', space=vmem, size = 0x2000, scoped, tag = 'input window, operand 0, single buffered']
    #allocation3 [shape = 's32[1]{0}', space=sflag, size = 0x4, scoped, tag = 'scoped memory for tpu_custom_call.1']
    #allocation4 [shape = 's32[1]{0}', space=sflag, size = 0x4, scoped, tag = 'scoped memory for tpu_custom_call.1']
    #allocation5 [shape = 'u8[4096]{0}', space=vmem, size = 0x1000, scoped, tag = 'input window, operand 1, single buffered']
    #allocation6 [shape = 's32[1]{0}', space=sflag, size = 0x4, scoped, tag = 'scoped memory for tpu_custom_call.1']
    #allocation7 [shape = 'u8[8192]{0}', space=vmem, size = 0x2000, scoped, tag = 'output window, operand 0, single buffered']
    %7 = vsyncpa [#allocation3], 0
    %8 = vsyncpa [#allocation6], 0
    %9 = vsyncpa [#allocation4], 0
    // Predicated region
    $region2: #{tpu_custom_call.1} parent=1 // pred_check
      _
    $region3: #{tpu_custom_call.1} parent=1 // pred_check_branch
      %11 = sbr.rel (0) target = $region5
    $region4: #{tpu_custom_call.1} parent=1 // pred_region
      %s13 = ssub.s32 256, 256
      %14 = vsyncadd [#allocation3], %s13
      %s16 = sshll.u32 [#allocation2], 4
      %s17 = int_to_ptr.vmem [resolvable:$true] %s16
      %19 = dma.hbm_to_vmem [thread:$0]  %s0, 256, %s17, [#allocation3]
    $region5: #{tpu_custom_call.1} parent=1 // pred_fallthru
      _
    // Predicated region
    $region6: #{tpu_custom_call.1} parent=1 // pred_check
      _
    $region7: #{tpu_custom_call.1} parent=1 // pred_check_branch
      %21 = sbr.rel (0) target = $region9
    $region8: #{tpu_custom_call.1} parent=1 // pred_region
      %s23 = ssub.s32 128, 128
      %24 = vsyncadd [#allocation6], %s23
      %s26 = sshll.u32 [#allocation5], 4
      %s27 = int_to_ptr.vmem [resolvable:$true] %s26
      %29 = dma.hbm_to_vmem [thread:$0]  %s1, 128, %s27, [#allocation6]
    $region9: #{tpu_custom_call.1} parent=1 // pred_fallthru
      _
    // Predicated region
    $region10: #{tpu_custom_call.1} parent=1 // pred_check
      _
    $region11: #{tpu_custom_call.1} parent=1 // pred_check_branch
      %31 = sbr.rel (0) target = $region13
    $region12: #{tpu_custom_call.1} parent=1 // pred_region
      %32 = dma.done [#allocation3], 256
    $region13: #{tpu_custom_call.1} parent=1 // pred_fallthru
      _
    // Predicated region
    $region14: #{tpu_custom_call.1} parent=1 // pred_check
      _
    $region15: #{tpu_custom_call.1} parent=1 // pred_check_branch
      %34 = sbr.rel (0) target = $region17
    $region16: #{tpu_custom_call.1} parent=1 // pred_region
      %35 = dma.done [#allocation6], 128
    $region17: #{tpu_custom_call.1} parent=1 // pred_fallthru
      _
    %v36 = vld [vmem:[#allocation2] sm:$0xff]
    %v37 = vld [vmem:[#allocation2 + $0x8] sm:$0xff]
    %v38 = vld [vmem:[#allocation5] sm:$0xff]
    %v39 = vmul.f32 %v36, 3.1415927
    %v40 = vmul.f32 %v37, 3.1415927
    %v41 = vand.u32 2147483647, %v39
    %vm42 = vcmp.le.f32.partialorder %v41, 0.7853982
    %vm43 = vcmp.lt.s32.totalorder %v39, 0
    %v44 = vand.u32 %v39, 2139095040
    %v45 = vshrl.u32 %v44, 23
    %v46 = vsub.s32 %v45, 127
    %v47 = vand.u32 2147483647, %v39
    %v48 = vand.u32 %v47, 8388607
    %v49 = vor.u32 %v48, 8388608
    %v50 = vsub.s32 0, %v49
    %v51 = vadd.s32 %v46, 1
    %vm52 = vcmp.gt.s32.totalorder %v51, 0
    %v53 = vsel %vm52, %v51, 0
    %v54 = vshrl.u32 %v53, 5
    %v55 = vand.u32 %v53, 31
    %v56 = vsub.s32 32, %v55
    %v57 = vshrl.u32 683565275, %v56
    %v58 = vshll.u32 683565275, %v55
    %v59 = vshrl.u32 2475754826, %v56
    %v60 = vor.u32 %v58, %v59
    %v61 = vshll.u32 2475754826, %v55
    %v62 = vshrl.u32 2131351028, %v56
    %v63 = vor.u32 %v61, %v62
    %v64 = vshll.u32 2131351028, %v55
    %v65 = vshrl.u32 2102212464, %v56
    %v66 = vor.u32 %v64, %v65
    %v67 = vshll.u32 2102212464, %v55
    %v68 = vshrl.u32 920167782, %v56
    %v69 = vor.u32 %v67, %v68
    %v70 = vshll.u32 920167782, %v55
    %v71 = vshrl.u32 1326507024, %v56
    %v72 = vor.u32 %v70, %v71
    %vm73 = vcmp.lt.s32.totalorder %v54, 1
    %vm74 = vcmp.lt.s32.totalorder %v54, 2
    %vm75 = vcmp.lt.s32.totalorder %v54, 3
    %vm76 = vcmp.lt.s32.totalorder %v54, 4
    %v77 = vsel %vm73, %v57, %v60
    %v78 = vsel %vm76, %v66, 2102212464
    %v79 = vsel %vm75, %v63, %v78
    %v80 = vsel %vm74, %v77, %v79
    %v81 = vsel %vm73, %v60, %v63
    %v82 = vsel %vm76, %v69, 920167782
    %v83 = vsel %vm75, %v66, %v82
    %v84 = vsel %vm74, %v81, %v83
    %v85 = vsel %vm73, %v63, %v66
    %v86 = vsel %vm76, %v72, 1326507024
    %v87 = vsel %vm75, %v69, %v86
    %v88 = vsel %vm74, %v85, %v87
    %v89 = vshll.u32 %v49, 8
    %v90 = vmul.u32.u64.compose %v89, %v88
    %v91 = vextract.low.u32 %v90
    %v92 = vextract.high.u32 %v90
    %v93 = vmul.u32.u64.compose %v89, %v84
    %v94 = vextract.low.u32 %v93
    %v95 = vextract.high.u32 %v93
    %v96 = vmul.u32 %v89, %v80
    %v97 = vadd.s32 %v92, %v94
    %vm98 = vc.u32 %v92, %v94
    %v99 = vadd.s32 %v95, 1
    %v100 = vsel %vm98, %v99, %v95
    %v101 = vadd.s32 %v96, %v100
    %v102 = vadd.s32 %v101, 536870912
    %v103 = vshrl.u32 %v102, 30
    %v104 = vshll.u32 %v103, 30
    %v105 = vsub.s32 %v101, %v104
    %vm106 = vcmp.lt.s32.totalorder %v105, 0
    %v107 = vsub.s32 0, %v105
    %v108 = vsel %vm106, %v107, %v105
    %v109 = vclz %v108
    %v110 = vsub.s32 %v109, 2
    %vm111 = vcmp.gt.s32.totalorder 0, %v110
    %v112 = vsel %vm111, 0, %v110
    %v113 = vsub.s32 32, %v112
    %v114 = vshll.u32 %v105, %v112
    %v115 = vshrl.u32 %v97, %v113
    %v116 = vor.u32 %v114, %v115
    %v117 = vsub.s32 4294967266, %v112
    %v118 = vadd.s32 %v117, 127
    %v119 = vshll.u32 %v118, 23
    %v120 = vor.u32 4788187, %v119
    %v121 = vand.u32 2147483647, %v120
    %v123 = vcvt.s32.f32 %v116
    %v124 = vmul.f32 %v123, %v121
    %v125 = vxor.u32 %v124, 2147483648
    %v126 = vsel %vm43, %v125, %v124
    %v127 = vsub.s32 4, %v103
    %v128 = vsel %vm43, %v127, %v103
    %v129 = vsel %vm42, %v39, %v126
    %v130 = vsel %vm42, 0, %v128
    %v131 = vcosq.f32.pop %v129
    %v132 = vsinq.f32.pop %v129
    %vm133 = vweird.f32 %v39
    %v134 = vadd.s32 %v130, 3
    %v135 = vand.u32 %v134, 3
    %vm136 = vcmp.lt.s32.totalorder %v135, 2
    %vm137 = vcmp.eq.s32.totalorder %v135, 0
    %v138 = vxor.u32 %v132, 2147483648
    %v139 = vsel %vm137, %v131, %v138
    %vm140 = vcmp.eq.s32.totalorder %v135, 2
    %v141 = vxor.u32 %v131, 2147483648
    %v142 = vsel %vm140, %v141, %v132
    %v143 = vsel %vm136, %v139, %v142
    %v144 = vsel %vm133, nan, %v143
    %v145 = vand.u32 2147483647, %v40
    %vm146 = vcmp.le.f32.partialorder %v145, 0.7853982
    %vm147 = vcmp.lt.s32.totalorder %v40, 0
    %v148 = vand.u32 %v40, 2139095040
    %v149 = vshrl.u32 %v148, 23
    %v150 = vsub.s32 %v149, 127
    %v151 = vand.u32 2147483647, %v40
    %v152 = vand.u32 %v151, 8388607
    %v153 = vor.u32 %v152, 8388608
    %v154 = vsub.s32 0, %v153
    %v155 = vadd.s32 %v150, 1
    %vm156 = vcmp.gt.s32.totalorder %v155, 0
    %v157 = vsel %vm156, %v155, 0
    %v158 = vshrl.u32 %v157, 5
    %v159 = vand.u32 %v157, 31
    %v160 = vsub.s32 32, %v159
    %v161 = vshrl.u32 683565275, %v160
    %v162 = vshll.u32 683565275, %v159
    %v163 = vshrl.u32 2475754826, %v160
    %v164 = vor.u32 %v162, %v163
    %v165 = vshll.u32 2475754826, %v159
    %v166 = vshrl.u32 2131351028, %v160
    %v167 = vor.u32 %v165, %v166
    %v168 = vshll.u32 2131351028, %v159
    %v169 = vshrl.u32 2102212464, %v160
    %v170 = vor.u32 %v168, %v169
    %v171 = vshll.u32 2102212464, %v159
    %v172 = vshrl.u32 920167782, %v160
    %v173 = vor.u32 %v171, %v172
    %v174 = vshll.u32 920167782, %v159
    %v175 = vshrl.u32 1326507024, %v160
    %v176 = vor.u32 %v174, %v175
    %vm177 = vcmp.lt.s32.totalorder %v158, 1
    %vm178 = vcmp.lt.s32.totalorder %v158, 2
    %vm179 = vcmp.lt.s32.totalorder %v158, 3
    %vm180 = vcmp.lt.s32.totalorder %v158, 4
    %v181 = vsel %vm177, %v161, %v164
    %v182 = vsel %vm180, %v170, 2102212464
    %v183 = vsel %vm179, %v167, %v182
    %v184 = vsel %vm178, %v181, %v183
    %v185 = vsel %vm177, %v164, %v167
    %v186 = vsel %vm180, %v173, 920167782
    %v187 = vsel %vm179, %v170, %v186
    %v188 = vsel %vm178, %v185, %v187
    %v189 = vsel %vm177, %v167, %v170
    %v190 = vsel %vm180, %v176, 1326507024
    %v191 = vsel %vm179, %v173, %v190
    %v192 = vsel %vm178, %v189, %v191
    %v193 = vshll.u32 %v153, 8
    %v194 = vmul.u32.u64.compose %v193, %v192
    %v195 = vextract.low.u32 %v194
    %v196 = vextract.high.u32 %v194
    %v197 = vmul.u32.u64.compose %v193, %v188
    %v198 = vextract.low.u32 %v197
    %v199 = vextract.high.u32 %v197
    %v200 = vmul.u32 %v193, %v184
    %v201 = vadd.s32 %v196, %v198
    %vm202 = vc.u32 %v196, %v198
    %v203 = vadd.s32 %v199, 1
    %v204 = vsel %vm202, %v203, %v199
    %v205 = vadd.s32 %v200, %v204
    %v206 = vadd.s32 %v205, 536870912
    %v207 = vshrl.u32 %v206, 30
    %v208 = vshll.u32 %v207, 30
    %v209 = vsub.s32 %v205, %v208
    %vm210 = vcmp.lt.s32.totalorder %v209, 0
    %v211 = vsub.s32 0, %v209
    %v212 = vsel %vm210, %v211, %v209
    %v213 = vclz %v212
    %v214 = vsub.s32 %v213, 2
    %vm215 = vcmp.gt.s32.totalorder 0, %v214
    %v216 = vsel %vm215, 0, %v214
    %v217 = vsub.s32 32, %v216
    %v218 = vshll.u32 %v209, %v216
    %v219 = vshrl.u32 %v201, %v217
    %v220 = vor.u32 %v218, %v219
    %v221 = vsub.s32 4294967266, %v216
    %v222 = vadd.s32 %v221, 127
    %v223 = vshll.u32 %v222, 23
    %v224 = vor.u32 4788187, %v223
    %v225 = vand.u32 2147483647, %v224
    %v227 = vcvt.s32.f32 %v220
    %v228 = vmul.f32 %v227, %v225
    %v229 = vxor.u32 %v228, 2147483648
    %v230 = vsel %vm147, %v229, %v228
    %v231 = vsub.s32 4, %v207
    %v232 = vsel %vm147, %v231, %v207
    %v233 = vsel %vm146, %v40, %v230
    %v234 = vsel %vm146, 0, %v232
    %v235 = vcosq.f32.pop %v233
    %v236 = vsinq.f32.pop %v233
    %vm237 = vweird.f32 %v40
    %v238 = vadd.s32 %v234, 3
    %v239 = vand.u32 %v238, 3
    %vm240 = vcmp.lt.s32.totalorder %v239, 2
    %vm241 = vcmp.eq.s32.totalorder %v239, 0
    %v242 = vxor.u32 %v236, 2147483648
    %v243 = vsel %vm241, %v235, %v242
    %vm244 = vcmp.eq.s32.totalorder %v239, 2
    %v245 = vxor.u32 %v235, 2147483648
    %v246 = vsel %vm244, %v245, %v236
    %v247 = vsel %vm240, %v243, %v246
    %v248 = vsel %vm237, nan, %v247
    %v249 = vand.u32 2147483647, %v39
    %vm250 = vcmp.le.f32.partialorder %v249, 0.7853982
    %vm251 = vcmp.lt.s32.totalorder %v39, 0
    %v252 = vand.u32 %v39, 2139095040
    %v253 = vshrl.u32 %v252, 23
    %v254 = vsub.s32 %v253, 127
    %v255 = vand.u32 2147483647, %v39
    %v256 = vand.u32 %v255, 8388607
    %v257 = vor.u32 %v256, 8388608
    %v258 = vsub.s32 0, %v257
    %v259 = vadd.s32 %v254, 1
    %vm260 = vcmp.gt.s32.totalorder %v259, 0
    %v261 = vsel %vm260, %v259, 0
    %v262 = vshrl.u32 %v261, 5
    %v263 = vand.u32 %v261, 31
    %v264 = vsub.s32 32, %v263
    %v265 = vshrl.u32 683565275, %v264
    %v266 = vshll.u32 683565275, %v263
    %v267 = vshrl.u32 2475754826, %v264
    %v268 = vor.u32 %v266, %v267
    %v269 = vshll.u32 2475754826, %v263
    %v270 = vshrl.u32 2131351028, %v264
    %v271 = vor.u32 %v269, %v270
    %v272 = vshll.u32 2131351028, %v263
    %v273 = vshrl.u32 2102212464, %v264
    %v274 = vor.u32 %v272, %v273
    %v275 = vshll.u32 2102212464, %v263
    %v276 = vshrl.u32 920167782, %v264
    %v277 = vor.u32 %v275, %v276
    %v278 = vshll.u32 920167782, %v263
    %v279 = vshrl.u32 1326507024, %v264
    %v280 = vor.u32 %v278, %v279
    %vm281 = vcmp.lt.s32.totalorder %v262, 1
    %vm282 = vcmp.lt.s32.totalorder %v262, 2
    %vm283 = vcmp.lt.s32.totalorder %v262, 3
    %vm284 = vcmp.lt.s32.totalorder %v262, 4
    %v285 = vsel %vm281, %v265, %v268
    %v286 = vsel %vm284, %v274, 2102212464
    %v287 = vsel %vm283, %v271, %v286
    %v288 = vsel %vm282, %v285, %v287
    %v289 = vsel %vm281, %v268, %v271
    %v290 = vsel %vm284, %v277, 920167782
    %v291 = vsel %vm283, %v274, %v290
    %v292 = vsel %vm282, %v289, %v291
    %v293 = vsel %vm281, %v271, %v274
    %v294 = vsel %vm284, %v280, 1326507024
    %v295 = vsel %vm283, %v277, %v294
    %v296 = vsel %vm282, %v293, %v295
    %v297 = vshll.u32 %v257, 8
    %v298 = vmul.u32.u64.compose %v297, %v296
    %v299 = vextract.low.u32 %v298
    %v300 = vextract.high.u32 %v298
    %v301 = vmul.u32.u64.compose %v297, %v292
    %v302 = vextract.low.u32 %v301
    %v303 = vextract.high.u32 %v301
    %v304 = vmul.u32 %v297, %v288
    %v305 = vadd.s32 %v300, %v302
    %vm306 = vc.u32 %v300, %v302
    %v307 = vadd.s32 %v303, 1
    %v308 = vsel %vm306, %v307, %v303
    %v309 = vadd.s32 %v304, %v308
    %v310 = vadd.s32 %v309, 536870912
    %v311 = vshrl.u32 %v310, 30
    %v312 = vshll.u32 %v311, 30
    %v313 = vsub.s32 %v309, %v312
    %vm314 = vcmp.lt.s32.totalorder %v313, 0
    %v315 = vsub.s32 0, %v313
    %v316 = vsel %vm314, %v315, %v313
    %v317 = vclz %v316
    %v318 = vsub.s32 %v317, 2
    %vm319 = vcmp.gt.s32.totalorder 0, %v318
    %v320 = vsel %vm319, 0, %v318
    %v321 = vsub.s32 32, %v320
    %v322 = vshll.u32 %v313, %v320
    %v323 = vshrl.u32 %v305, %v321
    %v324 = vor.u32 %v322, %v323
    %v325 = vsub.s32 4294967266, %v320
    %v326 = vadd.s32 %v325, 127
    %v327 = vshll.u32 %v326, 23
    %v328 = vor.u32 4788187, %v327
    %v329 = vand.u32 2147483647, %v328
    %v331 = vcvt.s32.f32 %v324
    %v332 = vmul.f32 %v331, %v329
    %v333 = vxor.u32 %v332, 2147483648
    %v334 = vsel %vm251, %v333, %v332
    %v335 = vsub.s32 4, %v311
    %v336 = vsel %vm251, %v335, %v311
    %v337 = vsel %vm250, %v39, %v334
    %v338 = vsel %vm250, 0, %v336
    %v339 = vcosq.f32.pop %v337
    %v340 = vsinq.f32.pop %v337
    %vm341 = vweird.f32 %v39
    %v342 = vand.u32 %v338, 3
    %vm343 = vcmp.lt.s32.totalorder %v342, 2
    %vm344 = vcmp.eq.s32.totalorder %v342, 0
    %v345 = vxor.u32 %v340, 2147483648
    %v346 = vsel %vm344, %v339, %v345
    %vm347 = vcmp.eq.s32.totalorder %v342, 2
    %v348 = vxor.u32 %v339, 2147483648
    %v349 = vsel %vm347, %v348, %v340
    %v350 = vsel %vm343, %v346, %v349
    %v351 = vsel %vm341, nan, %v350
    %v352 = vand.u32 2147483647, %v40
    %vm353 = vcmp.le.f32.partialorder %v352, 0.7853982
    %vm354 = vcmp.lt.s32.totalorder %v40, 0
    %v355 = vand.u32 %v40, 2139095040
    %v356 = vshrl.u32 %v355, 23
    %v357 = vsub.s32 %v356, 127
    %v358 = vand.u32 2147483647, %v40
    %v359 = vand.u32 %v358, 8388607
    %v360 = vor.u32 %v359, 8388608
    %v361 = vsub.s32 0, %v360
    %v362 = vadd.s32 %v357, 1
    %vm363 = vcmp.gt.s32.totalorder %v362, 0
    %v364 = vsel %vm363, %v362, 0
    %v365 = vshrl.u32 %v364, 5
    %v366 = vand.u32 %v364, 31
    %v367 = vsub.s32 32, %v366
    %v368 = vshrl.u32 683565275, %v367
    %v369 = vshll.u32 683565275, %v366
    %v370 = vshrl.u32 2475754826, %v367
    %v371 = vor.u32 %v369, %v370
    %v372 = vshll.u32 2475754826, %v366
    %v373 = vshrl.u32 2131351028, %v367
    %v374 = vor.u32 %v372, %v373
    %v375 = vshll.u32 2131351028, %v366
    %v376 = vshrl.u32 2102212464, %v367
    %v377 = vor.u32 %v375, %v376
    %v378 = vshll.u32 2102212464, %v366
    %v379 = vshrl.u32 920167782, %v367
    %v380 = vor.u32 %v378, %v379
    %v381 = vshll.u32 920167782, %v366
    %v382 = vshrl.u32 1326507024, %v367
    %v383 = vor.u32 %v381, %v382
    %vm384 = vcmp.lt.s32.totalorder %v365, 1
    %vm385 = vcmp.lt.s32.totalorder %v365, 2
    %vm386 = vcmp.lt.s32.totalorder %v365, 3
    %vm387 = vcmp.lt.s32.totalorder %v365, 4
    %v388 = vsel %vm384, %v368, %v371
    %v389 = vsel %vm387, %v377, 2102212464
    %v390 = vsel %vm386, %v374, %v389
    %v391 = vsel %vm385, %v388, %v390
    %v392 = vsel %vm384, %v371, %v374
    %v393 = vsel %vm387, %v380, 920167782
    %v394 = vsel %vm386, %v377, %v393
    %v395 = vsel %vm385, %v392, %v394
    %v396 = vsel %vm384, %v374, %v377
    %v397 = vsel %vm387, %v383, 1326507024
    %v398 = vsel %vm386, %v380, %v397
    %v399 = vsel %vm385, %v396, %v398
    %v400 = vshll.u32 %v360, 8
    %v401 = vmul.u32.u64.compose %v400, %v399
    %v402 = vextract.low.u32 %v401
    %v403 = vextract.high.u32 %v401
    %v404 = vmul.u32.u64.compose %v400, %v395
    %v405 = vextract.low.u32 %v404
    %v406 = vextract.high.u32 %v404
    %v407 = vmul.u32 %v400, %v391
    %v408 = vadd.s32 %v403, %v405
    %vm409 = vc.u32 %v403, %v405
    %v410 = vadd.s32 %v406, 1
    %v411 = vsel %vm409, %v410, %v406
    %v412 = vadd.s32 %v407, %v411
    %v413 = vadd.s32 %v412, 536870912
    %v414 = vshrl.u32 %v413, 30
    %v415 = vshll.u32 %v414, 30
    %v416 = vsub.s32 %v412, %v415
    %vm417 = vcmp.lt.s32.totalorder %v416, 0
    %v418 = vsub.s32 0, %v416
    %v419 = vsel %vm417, %v418, %v416
    %v420 = vclz %v419
    %v421 = vsub.s32 %v420, 2
    %vm422 = vcmp.gt.s32.totalorder 0, %v421
    %v423 = vsel %vm422, 0, %v421
    %v424 = vsub.s32 32, %v423
    %v425 = vshll.u32 %v416, %v423
    %v426 = vshrl.u32 %v408, %v424
    %v427 = vor.u32 %v425, %v426
    %v428 = vsub.s32 4294967266, %v423
    %v429 = vadd.s32 %v428, 127
    %v430 = vshll.u32 %v429, 23
    %v431 = vor.u32 4788187, %v430
    %v432 = vand.u32 2147483647, %v431
    %v434 = vcvt.s32.f32 %v427
    %v435 = vmul.f32 %v434, %v432
    %v436 = vxor.u32 %v435, 2147483648
    %v437 = vsel %vm354, %v436, %v435
    %v438 = vsub.s32 4, %v414
    %v439 = vsel %vm354, %v438, %v414
    %v440 = vsel %vm353, %v40, %v437
    %v441 = vsel %vm353, 0, %v439
    %v442 = vcosq.f32.pop %v440
    %v443 = vsinq.f32.pop %v440
    %vm444 = vweird.f32 %v40
    %v445 = vand.u32 %v441, 3
    %vm446 = vcmp.lt.s32.totalorder %v445, 2
    %vm447 = vcmp.eq.s32.totalorder %v445, 0
    %v448 = vxor.u32 %v443, 2147483648
    %v449 = vsel %vm447, %v442, %v448
    %vm450 = vcmp.eq.s32.totalorder %v445, 2
    %v451 = vxor.u32 %v442, 2147483648
    %v452 = vsel %vm450, %v451, %v443
    %v453 = vsel %vm446, %v449, %v452
    %v454 = vsel %vm444, nan, %v453
    %v455 = vmul.f32 %v351, 2.0
    %v456 = vmul.f32 %v454, 2.0
    %458 = vset.pattern.permute.xlu0 0
    %459 = vperm.xlu0 %458, %v38
    %v460 = vpop.permute.xlu0 %459
    %v462 = vmul.f32 %v460, %v144
    %v463 = vmul.f32 %v460, %v248
    %v464 = vadd.f32 %v36, %v462
    %v465 = vadd.f32 %v37, %v463
    %v466 = vmul.f32 %v455, %v144
    %v467 = vmul.f32 %v456, %v248
    %468 = vset.pattern.permute.xlu0 1
    %469 = vperm.xlu0 %468, %v38
    %v470 = vpop.permute.xlu0 %469
    %v472 = vmul.f32 %v470, %v466
    %v473 = vmul.f32 %v470, %v467
    %v474 = vadd.f32 %v464, %v472
    %v475 = vadd.f32 %v465, %v473
    %v476 = vmul.f32 %v455, %v466
    %v477 = vmul.f32 %v456, %v467
    %v478 = vsub.f32 %v476, %v144
    %v479 = vsub.f32 %v477, %v248
    %480 = vset.pattern.permute.xlu0 2
    %481 = vperm.xlu0 %480, %v38
    %v482 = vpop.permute.xlu0 %481
    %v484 = vmul.f32 %v482, %v478
    %v485 = vmul.f32 %v482, %v479
    %v486 = vadd.f32 %v474, %v484
    %v487 = vadd.f32 %v475, %v485
    %v488 = vmul.f32 %v455, %v478
    %v489 = vmul.f32 %v456, %v479
    %v490 = vsub.f32 %v488, %v466
    %v491 = vsub.f32 %v489, %v467
    %492 = vset.pattern.permute.xlu0 3
    %493 = vperm.xlu0 %492, %v38
    %v494 = vpop.permute.xlu0 %493
    %v496 = vmul.f32 %v494, %v490
    %v497 = vmul.f32 %v494, %v491
    %v498 = vadd.f32 %v486, %v496
    %v499 = vadd.f32 %v487, %v497
    %v500 = vmul.f32 %v455, %v490
    %v501 = vmul.f32 %v456, %v491
    %v502 = vsub.f32 %v500, %v478
    %v503 = vsub.f32 %v501, %v479
    %504 = vset.pattern.permute.xlu0 4
    %505 = vperm.xlu0 %504, %v38
    %v506 = vpop.permute.xlu0 %505
    %v508 = vmul.f32 %v506, %v502
    %v509 = vmul.f32 %v506, %v503
    %v510 = vadd.f32 %v498, %v508
    %v511 = vadd.f32 %v499, %v509
    %v512 = vmul.f32 %v455, %v502
    %v513 = vmul.f32 %v456, %v503
    %v514 = vsub.f32 %v512, %v490
    %v515 = vsub.f32 %v513, %v491
    %516 = vset.pattern.permute.xlu0 5
    %517 = vperm.xlu0 %516, %v38
    %v518 = vpop.permute.xlu0 %517
    %v520 = vmul.f32 %v518, %v514
    %v521 = vmul.f32 %v518, %v515
    %v522 = vadd.f32 %v510, %v520
    %v523 = vadd.f32 %v511, %v521
    %v524 = vmul.f32 %v455, %v514
    %v525 = vmul.f32 %v456, %v515
    %v526 = vsub.f32 %v524, %v502
    %v527 = vsub.f32 %v525, %v503
    %528 = vset.pattern.permute.xlu0 6
    %529 = vperm.xlu0 %528, %v38
    %v530 = vpop.permute.xlu0 %529
    %v532 = vmul.f32 %v530, %v526
    %v533 = vmul.f32 %v530, %v527
    %v534 = vadd.f32 %v522, %v532
    %v535 = vadd.f32 %v523, %v533
    %v536 = vmul.f32 %v455, %v526
    %v537 = vmul.f32 %v456, %v527
    %v538 = vsub.f32 %v536, %v514
    %v539 = vsub.f32 %v537, %v515
    %540 = vset.pattern.permute.xlu0 7
    %541 = vperm.xlu0 %540, %v38
    %v542 = vpop.permute.xlu0 %541
    %v544 = vmul.f32 %v542, %v538
    %v545 = vmul.f32 %v542, %v539
    %v546 = vadd.f32 %v534, %v544
    %v547 = vadd.f32 %v535, %v545
    %v548 = vmax.f32 %v546, 0.0
    %v549 = vmax.f32 %v547, 0.0
    %v550 = vmin.f32 %v548, 1.0
    %v551 = vmin.f32 %v549, 1.0
    %552 = vst [vmem:[#allocation7] sm:$0xff] %v550
    %553 = vst [vmem:[#allocation7 + $0x8] sm:$0xff] %v551
    // Predicated region
    $region18: #{tpu_custom_call.1} parent=1 // pred_check
      _
    $region19: #{tpu_custom_call.1} parent=1 // pred_check_branch
      %555 = sbr.rel (0) target = $region21
    $region20: #{tpu_custom_call.1} parent=1 // pred_region
      %s557 = ssub.s32 256, 256
      %558 = vsyncadd [#allocation4], %s557
      %s560 = sshll.u32 [#allocation7], 4
      %s561 = int_to_ptr.vmem [resolvable:$true] %s560
      %563 = dma.vmem_to_hbm [thread:$0]  %s561, 256, %s2, [#allocation4]
    $region21: #{tpu_custom_call.1} parent=1 // pred_fallthru
      _
    // Predicated region
    $region22: #{tpu_custom_call.1} parent=1 // pred_check
      _
    $region23: #{tpu_custom_call.1} parent=1 // pred_check_branch
      %565 = sbr.rel (0) target = $region25
    $region24: #{tpu_custom_call.1} parent=1 // pred_region
      %566 = dma.done [#allocation4], 256
    $region25: #{tpu_custom_call.1} parent=1 // pred_fallthru
      _
    %567 = vsyncpa [#allocation3], 1
    %568 = vsyncpa [#allocation6], 1
    %569 = vsyncpa [#allocation4], 1

</llo_original>
